<compile_context>
chip_gen: v6e
topology: v6e:2x2x1
jax: 0.10.0
libtpu: 0.0.40
codegen_flags: <defaults>
</compile_context>

<pallas_src>
import functools

import jax
import jax.numpy as jnp
from jax.experimental import pallas as pl
from jax.experimental.pallas import tpu as pltpu


def _cbam_kernel(x_ref, w1t_ref, w2t_ref, wsa_ref, o_ref, *, K):
    """CBAM forward for a (TB, C, L) block of the batch.

    x_ref   : (TB, C, L) VMEM  input block (TB batch elements at once)
    w1t_ref : (C, H)     VMEM  fc[0].weight.T
    w2t_ref : (H, C)     VMEM  fc[2].weight.T
    wsa_ref : (2, K)     SMEM  Conv1d(2 -> 1, K, bias=False) weight (squeezed)
    o_ref   : (TB, C, L) VMEM  output block
    """
    x = x_ref[...]                                    # keep native dtype (no full f32 copy)
    TB, C, L = x.shape

    # ---------- Channel attention (batched over TB and both pooling branches) ----------
    avg_c = jnp.mean(x, axis=-1, dtype=jnp.float32)           # (TB, C)
    max_c = jnp.max(x, axis=-1).astype(jnp.float32)           # (TB, C)
    pooled = jnp.concatenate([avg_c, max_c], axis=0)          # (2*TB, C)

    w1t = w1t_ref[...].astype(jnp.float32)                    # (C, H)
    w2t = w2t_ref[...].astype(jnp.float32)                    # (H, C)
    hid = jnp.maximum(
        jnp.dot(pooled, w1t, preferred_element_type=jnp.float32), 0.0)   # (2*TB, H)
    mlp = jnp.dot(hid, w2t, preferred_element_type=jnp.float32)          # (2*TB, C)
    ca = jax.nn.sigmoid(mlp[:TB] + mlp[TB:]).astype(x.dtype)             # (TB, C)

    x_ca = ca[:, :, None] * x                                 # (TB, C, L), native dtype

    # --------------------------------- Spatial attention -------------------------------
    avg_s = jnp.mean(x_ca, axis=1, dtype=jnp.float32)         # (TB, L)
    max_s = jnp.max(x_ca, axis=1).astype(jnp.float32)         # (TB, L)

    pad = K // 2
    avg_p = jnp.pad(avg_s, ((0, 0), (pad, pad)))              # (TB, L + 2*pad)
    max_p = jnp.pad(max_s, ((0, 0), (pad, pad)))

    # Hoist the 2*K SMEM scalar reads out of the accumulation loop.
    w_avg = [wsa_ref[0, k] for k in range(K)]
    w_max = [wsa_ref[1, k] for k in range(K)]

    # Conv1d(in=2, out=1, kernel=K, padding=K//2, bias=False) as an unrolled
    # sum of K shifted slices (cross-correlation, matching PyTorch semantics).
    conv = jnp.zeros((TB, L), jnp.float32)
    for k in range(K):
        conv = conv + w_avg[k] * avg_p[:, k:k + L] \
                    + w_max[k] * max_p[:, k:k + L]

    sa = jax.nn.sigmoid(conv).astype(x.dtype)                 # (TB, L)
    o_ref[...] = (sa[:, None, :] * x_ca).astype(o_ref.dtype)


def _pick_block_batch(B, C, L, itemsize, vmem_budget_bytes):
    """Largest batch-tile TB that divides B, fits the VMEM budget, and keeps
    at least 2 grid steps when B >= 2 (so both v7x TensorCores get work)."""
    def bytes_for(tb):
        # ~ double-buffered in/out blocks + f32 intermediates (x_ca, temps)
        return tb * C * L * (4 * itemsize + 8)

    cap = min(8, B if B == 1 else max(1, B // 2))
    tb = 1
    for cand in range(1, cap + 1):
        if B % cand == 0 and bytes_for(cand) <= vmem_budget_bytes:
            tb = cand
    return tb


def cbam_pallas(x, w1, w2, w_sa, *, block_batch=None):
    """x: (B, C, L); w1: (H, C) = fc[0].weight; w2: (C, H) = fc[2].weight; w_sa: (2, K)."""
    B, C, L = x.shape
    H = w1.shape[0]
    K = w_sa.shape[-1]
    assert K % 2 == 1, ("even kernel_size yields length L+1 in PyTorch Conv1d(padding=K//2); "
                        "only odd K is supported")
    assert w1.shape == (H, C) and w2.shape == (C, H) and w_sa.shape == (2, K)

    itemsize = jnp.dtype(x.dtype).itemsize
    vmem_budget = 20 * 1024 * 1024   # conservative so the tiling also fits v7x (64 MiB/TC)
    tb = block_batch if block_batch is not None else _pick_block_batch(
        B, C, L, itemsize, vmem_budget)
    assert B % tb == 0, f"block_batch={tb} must divide B={B}"
    # TODO(synk): for very large C*L a single (tb, C, L) block may still exceed v7x VMEM;
    # that case needs an L-tiled two-pass (running mean/max) channel-pooling structure.

    grid = (B // tb,)
    kernel = functools.partial(_cbam_kernel, K=K)

    cost = pl.CostEstimate(
        flops=8 * B * C * H + 6 * B * C * L + 4 * B * K * L,
        transcendentals=2 * B * (C + L),                      # sigmoids
        bytes_accessed=2 * B * C * L * itemsize + (2 * C * H + 2 * K) * 4,
    )

    return pl.pallas_call(
        kernel,
        out_shape=jax.ShapeDtypeStruct((B, C, L), x.dtype),
        grid=grid,
        in_specs=[
            pl.BlockSpec((tb, C, L), lambda b: (b, 0, 0)),
            pl.BlockSpec((C, H), lambda b: (0, 0)),
            pl.BlockSpec((H, C), lambda b: (0, 0)),
            pl.BlockSpec(memory_space=pltpu.MemorySpace.SMEM),
        ],
        out_specs=pl.BlockSpec((tb, C, L), lambda b: (b, 0, 0)),
        compiler_params=pltpu.CompilerParams(
            dimension_semantics=("parallel",),
            vmem_limit_bytes=48 * 1024 * 1024,
        ),
        cost_estimate=cost,
    )(x, w1.T, w2.T, w_sa)


def cbam_reference(x, w1, w2, w_sa):
    """Pure-JAX reference mirroring the PyTorch forward."""
    avg = jnp.mean(x, axis=-1)                                # (B, C)
    mx = jnp.max(x, axis=-1)                                  # (B, C)

    def fc(v):
        return jnp.maximum(v @ w1.T, 0.0) @ w2.T

    ca = jax.nn.sigmoid(fc(avg) + fc(mx))[:, :, None]
    x1 = ca * x

    avg_s = jnp.mean(x1, axis=1, keepdims=True)
    max_s = jnp.max(x1, axis=1, keepdims=True)
    s = jnp.concatenate([avg_s, max_s], axis=1)               # (B, 2, L)
    conv = jax.lax.conv_general_dilated(
        s, w_sa[None], window_strides=(1,),
        padding=[(w_sa.shape[-1] // 2, w_sa.shape[-1] // 2)],
        dimension_numbers=("NCH", "OIH", "NCH"))
    sa = jax.nn.sigmoid(conv)
    return sa * x1


if __name__ == "__main__":
    B, C, L = 4, 32, 128              # L = 128 -> lane-dense blocks; B=4 -> 2 grid steps
    reduction_ratio = 16
    H = C // reduction_ratio          # = 2
    K = 7

    key = jax.random.PRNGKey(0)
    kx, k1, k2, k3 = jax.random.split(key, 4)
    x = jax.random.normal(kx, (B, C, L), dtype=jnp.float32)
    # PyTorch shapes: Linear weight is (out, in); Conv1d weight (1, 2, K) squeezed to (2, K).
    w1 = jax.random.normal(k1, (H, C), dtype=jnp.float32) * 0.2     # fc[0].weight
    w2 = jax.random.normal(k2, (C, H), dtype=jnp.float32) * 0.2     # fc[2].weight
    w_sa = jax.random.normal(k3, (2, K), dtype=jnp.float32) * 0.2   # conv1.weight[0]

    out = jax.block_until_ready(cbam_pallas(x, w1, w2, w_sa))
    ref = jax.block_until_ready(cbam_reference(x, w1, w2, w_sa))

    assert out.shape == (B, C, L)
    err = jnp.max(jnp.abs(out - ref))
    assert jnp.allclose(out, ref, atol=1e-4, rtol=1e-4), f"max abs err {err}"
    print("KERNEL_OK")
</pallas_src>

<mosaic_0001>
module attributes {stable_mosaic.version = 11 : i64} {
  func.func @_cbam_kernel(%arg0: i32, %arg1: memref<2x32x128xf32, #tpu.memory_space<vmem>>, %arg2: memref<32x2xf32, #tpu.memory_space<vmem>>, %arg3: memref<2x32xf32, #tpu.memory_space<vmem>>, %arg4: memref<2x7xf32, #tpu.memory_space<smem>>, %arg5: memref<2x32x128xf32, #tpu.memory_space<vmem>>) attributes {dimension_semantics = [#tpu.dimension_semantics<parallel>], iteration_bounds = array<i64: 2>, scalar_prefetch = 0 : i64, scratch_operands = 0 : i64, tpu.core_type = #tpu.core_type<tc>, window_params = [{transform_indices = @transform_0, window_bounds = array<i64: 2, 32, 128>}, {pipeline_mode = #tpu.pipeline_mode<synchronous>, transform_indices = @transform_1, window_bounds = array<i64: 32, 2>}, {pipeline_mode = #tpu.pipeline_mode<synchronous>, transform_indices = @transform_2, window_bounds = array<i64: 2, 32>}, {transform_indices = @transform_3, window_bounds = array<i64: 2, 7>}, {transform_indices = @transform_4, window_bounds = array<i64: 2, 32, 128>}]} {
    %c0 = arith.constant 0 : index
    %c0_0 = arith.constant 0 : index
    %c0_1 = arith.constant 0 : index
    %0 = vector.load %arg1[%c0, %c0_0, %c0_1] : memref<2x32x128xf32, #tpu.memory_space<vmem>>, vector<2x32x128xf32>
    %cst = arith.constant dense<0.000000e+00> : vector<2x32xf32>
    %1 = vector.multi_reduction <add>, %0, %cst [2] : vector<2x32x128xf32> to vector<2x32xf32>
    %cst_2 = arith.constant 1.280000e+02 : f32
    %2 = vector.broadcast %cst_2 : f32 to vector<2x32xf32>
    %3 = arith.divf %1, %2 : vector<2x32xf32>
    %cst_3 = arith.constant dense<0xFF800000> : vector<2x32xf32>
    %4 = vector.multi_reduction <maximumf>, %0, %cst_3 [2] : vector<2x32x128xf32> to vector<2x32xf32>
    %5 = tpu.concatenate %3, %4 in 0 : vector<2x32xf32>, vector<2x32xf32> -> vector<4x32xf32>
    %c0_4 = arith.constant 0 : index
    %c0_5 = arith.constant 0 : index
    %6 = vector.load %arg2[%c0_4, %c0_5] : memref<32x2xf32, #tpu.memory_space<vmem>>, vector<32x2xf32>
    %c0_6 = arith.constant 0 : index
    %c0_7 = arith.constant 0 : index
    %7 = vector.load %arg3[%c0_6, %c0_7] : memref<2x32xf32, #tpu.memory_space<vmem>>, vector<2x32xf32>
    %cst_8 = arith.constant dense<0.000000e+00> : vector<4x2xf32>
    %8 = tpu.matmul %5, %6, %cst_8 {dimension_numbers = #tpu.dot_dimension_numbers<[1], [0], [0], [1], [0, 0, 1, 1], [], []>} : vector<4x32xf32>, vector<32x2xf32>, vector<4x2xf32> -> vector<4x2xf32>
    %cst_9 = arith.constant 0.000000e+00 : f32
    %9 = vector.broadcast %cst_9 : f32 to vector<4x2xf32>
    %10 = arith.maximumf %8, %9 : vector<4x2xf32>
    %cst_10 = arith.constant dense<0.000000e+00> : vector<4x32xf32>
    %11 = tpu.matmul %10, %7, %cst_10 {dimension_numbers = #tpu.dot_dimension_numbers<[1], [0], [0], [1], [0, 0, 1, 1], [], []>} : vector<4x2xf32>, vector<2x32xf32>, vector<4x32xf32> -> vector<4x32xf32>
    %12 = vector.extract_strided_slice %11 {offsets = [0, 0], sizes = [2, 32], strides = [1, 1]} : vector<4x32xf32> to vector<2x32xf32>
    %13 = vector.extract_strided_slice %11 {offsets = [2, 0], sizes = [2, 32], strides = [1, 1]} : vector<4x32xf32> to vector<2x32xf32>
    %14 = arith.addf %12, %13 : vector<2x32xf32>
    %15 = arith.negf %14 : vector<2x32xf32>
    %16 = math.exp %15 : vector<2x32xf32>
    %cst_11 = arith.constant 1.000000e+00 : f32
    %17 = vector.broadcast %cst_11 : f32 to vector<2x32xf32>
    %18 = arith.addf %17, %16 : vector<2x32xf32>
    %19 = arith.divf %17, %18 : vector<2x32xf32>
    %20 = vector.shape_cast %19 : vector<2x32xf32> to vector<2x32x1xf32>
    %21 = vector.broadcast %20 : vector<2x32x1xf32> to vector<2x32x128xf32>
    %22 = arith.mulf %21, %0 : vector<2x32x128xf32>
    %cst_12 = arith.constant dense<0.000000e+00> : vector<2x128xf32>
    %23 = vector.multi_reduction <add>, %22, %cst_12 [1] : vector<2x32x128xf32> to vector<2x128xf32>
    %cst_13 = arith.constant 3.200000e+01 : f32
    %24 = vector.broadcast %cst_13 : f32 to vector<2x128xf32>
    %25 = arith.divf %23, %24 : vector<2x128xf32>
    %cst_14 = arith.constant dense<0xFF800000> : vector<2x128xf32>
    %26 = vector.multi_reduction <maximumf>, %22, %cst_14 [1] : vector<2x32x128xf32> to vector<2x128xf32>
    %c0_i32 = arith.constant 0 : i32
    %27 = arith.sitofp %c0_i32 : i32 to f32
    %28 = vector.broadcast %27 : f32 to vector<2x3xf32>
    %29 = tpu.concatenate %28, %25 in 1 : vector<2x3xf32>, vector<2x128xf32> -> vector<2x131xf32>
    %30 = vector.broadcast %27 : f32 to vector<2x3xf32>
    %31 = tpu.concatenate %29, %30 in 1 : vector<2x131xf32>, vector<2x3xf32> -> vector<2x134xf32>
    %c0_i32_15 = arith.constant 0 : i32
    %32 = arith.sitofp %c0_i32_15 : i32 to f32
    %33 = vector.broadcast %32 : f32 to vector<2x3xf32>
    %34 = tpu.concatenate %33, %26 in 1 : vector<2x3xf32>, vector<2x128xf32> -> vector<2x131xf32>
    %35 = vector.broadcast %32 : f32 to vector<2x3xf32>
    %36 = tpu.concatenate %34, %35 in 1 : vector<2x131xf32>, vector<2x3xf32> -> vector<2x134xf32>
    %c0_16 = arith.constant 0 : index
    %c0_17 = arith.constant 0 : index
    %37 = memref.load %arg4[%c0_16, %c0_17] : memref<2x7xf32, #tpu.memory_space<smem>>
    %c0_18 = arith.constant 0 : index
    %c1 = arith.constant 1 : index
    %38 = memref.load %arg4[%c0_18, %c1] : memref<2x7xf32, #tpu.memory_space<smem>>
    %c0_19 = arith.constant 0 : index
    %c2 = arith.constant 2 : index
    %39 = memref.load %arg4[%c0_19, %c2] : memref<2x7xf32, #tpu.memory_space<smem>>
    %c0_20 = arith.constant 0 : index
    %c3 = arith.constant 3 : index
    %40 = memref.load %arg4[%c0_20, %c3] : memref<2x7xf32, #tpu.memory_space<smem>>
    %c0_21 = arith.constant 0 : index
    %c4 = arith.constant 4 : index
    %41 = memref.load %arg4[%c0_21, %c4] : memref<2x7xf32, #tpu.memory_space<smem>>
    %c0_22 = arith.constant 0 : index
    %c5 = arith.constant 5 : index
    %42 = memref.load %arg4[%c0_22, %c5] : memref<2x7xf32, #tpu.memory_space<smem>>
    %c0_23 = arith.constant 0 : index
    %c6 = arith.constant 6 : index
    %43 = memref.load %arg4[%c0_23, %c6] : memref<2x7xf32, #tpu.memory_space<smem>>
    %c1_24 = arith.constant 1 : index
    %c0_25 = arith.constant 0 : index
    %44 = memref.load %arg4[%c1_24, %c0_25] : memref<2x7xf32, #tpu.memory_space<smem>>
    %c1_26 = arith.constant 1 : index
    %c1_27 = arith.constant 1 : index
    %45 = memref.load %arg4[%c1_26, %c1_27] : memref<2x7xf32, #tpu.memory_space<smem>>
    %c1_28 = arith.constant 1 : index
    %c2_29 = arith.constant 2 : index
    %46 = memref.load %arg4[%c1_28, %c2_29] : memref<2x7xf32, #tpu.memory_space<smem>>
    %c1_30 = arith.constant 1 : index
    %c3_31 = arith.constant 3 : index
    %47 = memref.load %arg4[%c1_30, %c3_31] : memref<2x7xf32, #tpu.memory_space<smem>>
    %c1_32 = arith.constant 1 : index
    %c4_33 = arith.constant 4 : index
    %48 = memref.load %arg4[%c1_32, %c4_33] : memref<2x7xf32, #tpu.memory_space<smem>>
    %c1_34 = arith.constant 1 : index
    %c5_35 = arith.constant 5 : index
    %49 = memref.load %arg4[%c1_34, %c5_35] : memref<2x7xf32, #tpu.memory_space<smem>>
    %c1_36 = arith.constant 1 : index
    %c6_37 = arith.constant 6 : index
    %50 = memref.load %arg4[%c1_36, %c6_37] : memref<2x7xf32, #tpu.memory_space<smem>>
    %cst_38 = arith.constant 0.000000e+00 : f32
    %51 = vector.broadcast %cst_38 : f32 to vector<2x128xf32>
    %52 = vector.extract_strided_slice %31 {offsets = [0, 0], sizes = [2, 128], strides = [1, 1]} : vector<2x134xf32> to vector<2x128xf32>
    %53 = vector.broadcast %37 : f32 to vector<2x128xf32>
    %54 = arith.mulf %53, %52 : vector<2x128xf32>
    %55 = arith.addf %51, %54 : vector<2x128xf32>
    %56 = vector.extract_strided_slice %36 {offsets = [0, 0], sizes = [2, 128], strides = [1, 1]} : vector<2x134xf32> to vector<2x128xf32>
    %57 = vector.broadcast %44 : f32 to vector<2x128xf32>
    %58 = arith.mulf %57, %56 : vector<2x128xf32>
    %59 = arith.addf %55, %58 : vector<2x128xf32>
    %60 = vector.extract_strided_slice %31 {offsets = [0, 1], sizes = [2, 128], strides = [1, 1]} : vector<2x134xf32> to vector<2x128xf32>
    %61 = vector.broadcast %38 : f32 to vector<2x128xf32>
    %62 = arith.mulf %61, %60 : vector<2x128xf32>
    %63 = arith.addf %59, %62 : vector<2x128xf32>
    %64 = vector.extract_strided_slice %36 {offsets = [0, 1], sizes = [2, 128], strides = [1, 1]} : vector<2x134xf32> to vector<2x128xf32>
    %65 = vector.broadcast %45 : f32 to vector<2x128xf32>
    %66 = arith.mulf %65, %64 : vector<2x128xf32>
    %67 = arith.addf %63, %66 : vector<2x128xf32>
    %68 = vector.extract_strided_slice %31 {offsets = [0, 2], sizes = [2, 128], strides = [1, 1]} : vector<2x134xf32> to vector<2x128xf32>
    %69 = vector.broadcast %39 : f32 to vector<2x128xf32>
    %70 = arith.mulf %69, %68 : vector<2x128xf32>
    %71 = arith.addf %67, %70 : vector<2x128xf32>
    %72 = vector.extract_strided_slice %36 {offsets = [0, 2], sizes = [2, 128], strides = [1, 1]} : vector<2x134xf32> to vector<2x128xf32>
    %73 = vector.broadcast %46 : f32 to vector<2x128xf32>
    %74 = arith.mulf %73, %72 : vector<2x128xf32>
    %75 = arith.addf %71, %74 : vector<2x128xf32>
    %76 = vector.extract_strided_slice %31 {offsets = [0, 3], sizes = [2, 128], strides = [1, 1]} : vector<2x134xf32> to vector<2x128xf32>
    %77 = vector.broadcast %40 : f32 to vector<2x128xf32>
    %78 = arith.mulf %77, %76 : vector<2x128xf32>
    %79 = arith.addf %75, %78 : vector<2x128xf32>
    %80 = vector.extract_strided_slice %36 {offsets = [0, 3], sizes = [2, 128], strides = [1, 1]} : vector<2x134xf32> to vector<2x128xf32>
    %81 = vector.broadcast %47 : f32 to vector<2x128xf32>
    %82 = arith.mulf %81, %80 : vector<2x128xf32>
    %83 = arith.addf %79, %82 : vector<2x128xf32>
    %84 = vector.extract_strided_slice %31 {offsets = [0, 4], sizes = [2, 128], strides = [1, 1]} : vector<2x134xf32> to vector<2x128xf32>
    %85 = vector.broadcast %41 : f32 to vector<2x128xf32>
    %86 = arith.mulf %85, %84 : vector<2x128xf32>
    %87 = arith.addf %83, %86 : vector<2x128xf32>
    %88 = vector.extract_strided_slice %36 {offsets = [0, 4], sizes = [2, 128], strides = [1, 1]} : vector<2x134xf32> to vector<2x128xf32>
    %89 = vector.broadcast %48 : f32 to vector<2x128xf32>
    %90 = arith.mulf %89, %88 : vector<2x128xf32>
    %91 = arith.addf %87, %90 : vector<2x128xf32>
    %92 = vector.extract_strided_slice %31 {offsets = [0, 5], sizes = [2, 128], strides = [1, 1]} : vector<2x134xf32> to vector<2x128xf32>
    %93 = vector.broadcast %42 : f32 to vector<2x128xf32>
    %94 = arith.mulf %93, %92 : vector<2x128xf32>
    %95 = arith.addf %91, %94 : vector<2x128xf32>
    %96 = vector.extract_strided_slice %36 {offsets = [0, 5], sizes = [2, 128], strides = [1, 1]} : vector<2x134xf32> to vector<2x128xf32>
    %97 = vector.broadcast %49 : f32 to vector<2x128xf32>
    %98 = arith.mulf %97, %96 : vector<2x128xf32>
    %99 = arith.addf %95, %98 : vector<2x128xf32>
    %100 = vector.extract_strided_slice %31 {offsets = [0, 6], sizes = [2, 128], strides = [1, 1]} : vector<2x134xf32> to vector<2x128xf32>
    %101 = vector.broadcast %43 : f32 to vector<2x128xf32>
    %102 = arith.mulf %101, %100 : vector<2x128xf32>
    %103 = arith.addf %99, %102 : vector<2x128xf32>
    %104 = vector.extract_strided_slice %36 {offsets = [0, 6], sizes = [2, 128], strides = [1, 1]} : vector<2x134xf32> to vector<2x128xf32>
    %105 = vector.broadcast %50 : f32 to vector<2x128xf32>
    %106 = arith.mulf %105, %104 : vector<2x128xf32>
    %107 = arith.addf %103, %106 : vector<2x128xf32>
    %108 = arith.negf %107 : vector<2x128xf32>
    %109 = math.exp %108 : vector<2x128xf32>
    %cst_39 = arith.constant 1.000000e+00 : f32
    %110 = vector.broadcast %cst_39 : f32 to vector<2x128xf32>
    %111 = arith.addf %110, %109 : vector<2x128xf32>
    %112 = arith.divf %110, %111 : vector<2x128xf32>
    %113 = vector.shape_cast %112 : vector<2x128xf32> to vector<2x1x128xf32>
    %114 = vector.broadcast %113 : vector<2x1x128xf32> to vector<2x32x128xf32>
    %115 = arith.mulf %114, %22 : vector<2x32x128xf32>
    %c0_40 = arith.constant 0 : index
    %c0_41 = arith.constant 0 : index
    %c0_42 = arith.constant 0 : index
    %116 = vector.load %arg5[%c0_40, %c0_41, %c0_42] : memref<2x32x128xf32, #tpu.memory_space<vmem>>, vector<2x32x128xf32>
    tpu.vector_store %arg5[%c0_40, %c0_41, %c0_42], %115 {strides = array<i32>} : memref<2x32x128xf32, #tpu.memory_space<vmem>>, vector<2x32x128xf32>,
    return
  }
  func.func @transform_0(%arg0: i32) -> (i32, i32, i32) {
    %c0_i32 = arith.constant 0 : i32
    %c0_i32_0 = arith.constant 0 : i32
    %c0_i32_1 = arith.constant 0 : i32
    return %arg0, %c0_i32, %c0_i32_0 : i32, i32, i32
  }
  func.func @transform_1(%arg0: i32) -> (i32, i32) {
    %c0_i32 = arith.constant 0 : i32
    %c0_i32_0 = arith.constant 0 : i32
    %c0_i32_1 = arith.constant 0 : i32
    return %c0_i32, %c0_i32_0 : i32, i32
  }
  func.func @transform_2(%arg0: i32) -> (i32, i32) {
    %c0_i32 = arith.constant 0 : i32
    %c0_i32_0 = arith.constant 0 : i32
    %c0_i32_1 = arith.constant 0 : i32
    return %c0_i32, %c0_i32_0 : i32, i32
  }
  func.func @transform_3(%arg0: i32) -> (i32, i32) {
    %c0_i32 = arith.constant 0 : i32
    %c0_i32_0 = arith.constant 0 : i32
    %c0_i32_1 = arith.constant 0 : i32
    return %c0_i32, %c0_i32_0 : i32, i32
  }
  func.func @transform_4(%arg0: i32) -> (i32, i32, i32) {
    %c0_i32 = arith.constant 0 : i32
    %c0_i32_0 = arith.constant 0 : i32
    %c0_i32_1 = arith.constant 0 : i32
    return %arg0, %c0_i32, %c0_i32_0 : i32, i32, i32
  }
}

</mosaic_0001>

<llo_original>
// kernel: tpu_custom_call.1
$region0: #{tpu_custom_call.1}
  #allocation0 [shape = 'u32[]', space=smem, size = 0x4, offset = 0x4, fixed_abs, tag = 'smem constant byte address 0x4 - core index']
  #allocation1 [shape = 'u32[144,128]{1,0:T(1,128)}', space=vmem, size = 0x12000, scoped, tag = 'internal scratch']
  %s0 = inlined_call_operand.hbm [shape: f32[4,32,128], index: 0, kind: input, shape index: {}]
  %s1 = inlined_call_operand.vmem [shape: f32[32,2], index: 1, kind: input, shape index: {}]
  %s2 = inlined_call_operand.vmem [shape: f32[2,32], index: 2, kind: input, shape index: {}]
  %s3 = inlined_call_operand.vmem [shape: f32[2,7], index: 3, kind: input, shape index: {}]
  %s4 = inlined_call_operand.hbm [shape: f32[4,32,128], index: 4, kind: output, shape index: {}]
  %s5 = sld [smem:[#allocation0]]
  $region57: #{tpu_custom_call.1} parent=0
    _
  %s7 = ssub.s32 1, %s5
  %s8 = scalar_select 0, %s7, %s5
  $region1: #{tpu_custom_call.1} parent=0
    #allocation2 [shape = 'u8[65536]{0}', space=vmem, size = 0x10000, scoped, tag = 'input window, operand 0']
    #allocation3 [shape = 's32[2]{0}', space=sflag, size = 0x8, scoped, tag = 'scoped memory for tpu_custom_call.1']
    #allocation4 [shape = 's32[2]{0}', space=sflag, size = 0x8, scoped, tag = 'scoped memory for tpu_custom_call.1']
    #allocation5 [shape = 's32[2]{0}', space=sflag, size = 0x8, scoped, tag = 'scoped memory for tpu_custom_call.1']
    #allocation6 [shape = 'u8[1024]{0}', space=smem, size = 0x400, scoped, tag = 'input window, operand 3, single buffered']
    #allocation7 [shape = 'u8[65536]{0}', space=vmem, size = 0x10000, scoped, tag = 'output window, operand 0']
    %9 = vsyncpa [#allocation3], 0
    %s10 = scalar_lea.sflag [#allocation3], 1
    %11 = vsyncpa %s10, 0
    %12 = vsyncpa [#allocation5], 0
    %13 = vsyncpa [#allocation4], 0
    %s14 = scalar_lea.sflag [#allocation4], 1
    %15 = vsyncpa %s14, 0
    loop: start=0, step=1, limit=4
    $region2: #{tpu_custom_call.1} parent=1 // loop_pre_header
      _
    $region3: #{tpu_custom_call.1} parent=1 // loop_header
      %s17 = sphi 0, %s21
      %p18 = scmp.ge.s32.totalorder %s17, 4
      %s27 = sphi 0, %s29
      %s30 = sphi 0, %s27
      %s31 = sphi 0, %s30
      %s47 = sphi 0, %s31
      %s51 = sphi 0, %s51
      %s53 = sphi 0, %s51
      %s54 = sphi 0, %s53
      %s68 = sphi 0, %s54
      %s72 = sphi 0, %s72
      %s74 = sphi 0, %s72
      %s75 = sphi 0, %s74
      %s89 = sphi 0, %s75
      %s93 = sphi 0, %s93
      %s95 = sphi 0, %s93
      %s96 = sphi 0, %s95
      %s110 = sphi 0, %s96
      %s116 = sphi 0, %s118
      %s119 = sphi 0, %s116
      %s120 = sphi 0, %s119
      %s136 = sphi 0, %s120
    $region4: #{tpu_custom_call.1} parent=1 // loop_header_branch
      %20 = sbr.rel (%p18) target = $region8
    $region5: #{tpu_custom_call.1} parent=1 // loop_body
      %s22 = ssub.s32 %s17, 1
      %s23 = ssub.s32 %s17, 2
      %s24 = sadd.s32 %s17, 1
      %s25 = ssub.s32 %s17, %s24
      %p26 = scmp.eq.s32.totalorder %s25, 0
      %s28 = sadd.s32 %s27, 1
      %s29 = scalar_select %p26, %s27, %s28
      %p32 = pneg %p26
      %p33 = scmp.eq.s32.totalorder %s17, 1
      %p34 = por %p32, %p33
      %p35 = scmp.ne.s32.totalorder %s27, %s30
      %p36 = scmp.eq.s32.totalorder %s17, 0
      %p37 = por %p35, %p36
      %p38 = scmp.ne.s32.totalorder %s27, %s30
      %p39 = scmp.eq.s32.totalorder %s22, 1
      %p40 = por %p38, %p39
      %p41 = scmp.ne.s32.totalorder %s30, %s31
      %p42 = scmp.eq.s32.totalorder %s22, 0
      %p43 = por %p41, %p42
      %p44 = scmp.ne.s32.totalorder %s30, %s31
      %p45 = scmp.eq.s32.totalorder %s23, 1
      %p46 = por %p44, %p45
      %p48 = scmp.ne.s32.totalorder %s31, %s47
      %p49 = scmp.eq.s32.totalorder %s23, 0
      %p50 = por %p48, %p49
      %s52 = sadd.s32 %s51, 1
      %p55 = scmp.eq.s32.totalorder %s17, 1
      %p56 = scmp.ne.s32.totalorder %s51, %s53
      %p57 = scmp.eq.s32.totalorder %s17, 0
      %p58 = por %p56, %p57
      %p59 = scmp.ne.s32.totalorder %s51, %s53
      %p60 = scmp.eq.s32.totalorder %s22, 1
      %p61 = por %p59, %p60
      %p62 = scmp.ne.s32.totalorder %s53, %s54
      %p63 = scmp.eq.s32.totalorder %s22, 0
      %p64 = por %p62, %p63
      %p65 = scmp.ne.s32.totalorder %s53, %s54
      %p66 = scmp.eq.s32.totalorder %s23, 1
      %p67 = por %p65, %p66
      %p69 = scmp.ne.s32.totalorder %s54, %s68
      %p70 = scmp.eq.s32.totalorder %s23, 0
      %p71 = por %p69, %p70
      %s73 = sadd.s32 %s72, 1
      %p76 = scmp.eq.s32.totalorder %s17, 1
      %p77 = scmp.ne.s32.totalorder %s72, %s74
      %p78 = scmp.eq.s32.totalorder %s17, 0
      %p79 = por %p77, %p78
      %p80 = scmp.ne.s32.totalorder %s72, %s74
      %p81 = scmp.eq.s32.totalorder %s22, 1
      %p82 = por %p80, %p81
      %p83 = scmp.ne.s32.totalorder %s74, %s75
      %p84 = scmp.eq.s32.totalorder %s22, 0
      %p85 = por %p83, %p84
      %p86 = scmp.ne.s32.totalorder %s74, %s75
      %p87 = scmp.eq.s32.totalorder %s23, 1
      %p88 = por %p86, %p87
      %p90 = scmp.ne.s32.totalorder %s75, %s89
      %p91 = scmp.eq.s32.totalorder %s23, 0
      %p92 = por %p90, %p91
      %s94 = sadd.s32 %s93, 1
      %p97 = scmp.eq.s32.totalorder %s17, 1
      %p98 = scmp.ne.s32.totalorder %s93, %s95
      %p99 = scmp.eq.s32.totalorder %s17, 0
      %p100 = por %p98, %p99
      %p101 = scmp.ne.s32.totalorder %s93, %s95
      %p102 = scmp.eq.s32.totalorder %s22, 1
      %p103 = por %p101, %p102
      %p104 = scmp.ne.s32.totalorder %s95, %s96
      %p105 = scmp.eq.s32.totalorder %s22, 0
      %p106 = por %p104, %p105
      %p107 = scmp.ne.s32.totalorder %s95, %s96
      %p108 = scmp.eq.s32.totalorder %s23, 1
      %p109 = por %p107, %p108
      %p111 = scmp.ne.s32.totalorder %s96, %s110
      %p112 = scmp.eq.s32.totalorder %s23, 0
      %p113 = por %p111, %p112
      %s114 = ssub.s32 %s17, %s24
      %p115 = scmp.eq.s32.totalorder %s114, 0
      %s117 = sadd.s32 %s116, 1
      %s118 = scalar_select %p115, %s116, %s117
      %p121 = pneg %p115
      %p122 = scmp.eq.s32.totalorder %s17, 1
      %p123 = por %p121, %p122
      %p124 = scmp.ne.s32.totalorder %s116, %s119
      %p125 = scmp.eq.s32.totalorder %s17, 0
      %p126 = por %p124, %p125
      %p127 = scmp.ne.s32.totalorder %s116, %s119
      %p128 = scmp.eq.s32.totalorder %s22, 1
      %p129 = por %p127, %p128
      %p130 = scmp.ne.s32.totalorder %s119, %s120
      %p131 = scmp.eq.s32.totalorder %s22, 0
      %p132 = por %p130, %p131
      %p133 = scmp.ne.s32.totalorder %s119, %s120
      %p134 = scmp.eq.s32.totalorder %s23, 1
      %p135 = por %p133, %p134
      %p137 = scmp.ne.s32.totalorder %s120, %s136
      %p138 = scmp.eq.s32.totalorder %s23, 0
      %p139 = por %p137, %p138
      %p140 = scmp.le.s32.totalorder 1, %s17
      %p141 = scmp.lt.s32.totalorder %s17, 3
      %p142 = pnand %p140, %p141
      %p143 = pneg %p142
      // Predicated region
      $region9: #{tpu_custom_call.1} parent=5 // pred_check
        _
      $region10: #{tpu_custom_call.1} parent=5 // pred_check_branch
        %145 = sbr.rel (%p142) target = $region12
      $region11: #{tpu_custom_call.1} parent=5 // pred_region
        %s146 = ssub.s32 %s17, 1
        // Predicated region
        $region13: #{tpu_custom_call.1} parent=11 // pred_check
          %p147 = pneg %p64
        $region14: #{tpu_custom_call.1} parent=11 // pred_check_branch
          %149 = sbr.rel (%p147) target = $region16
        $region15: #{tpu_custom_call.1} parent=11 // pred_region
          _
        $region16: #{tpu_custom_call.1} parent=11 // pred_fallthru
          _
        // Predicated region
        $region17: #{tpu_custom_call.1} parent=11 // pred_check
          %p150 = pneg %p85
        $region18: #{tpu_custom_call.1} parent=11 // pred_check_branch
          %152 = sbr.rel (%p150) target = $region20
        $region19: #{tpu_custom_call.1} parent=11 // pred_region
          _
        $region20: #{tpu_custom_call.1} parent=11 // pred_fallthru
          _
        // Predicated region
        $region21: #{tpu_custom_call.1} parent=11 // pred_check
          %p153 = pneg %p106
        $region22: #{tpu_custom_call.1} parent=11 // pred_check_branch
          %155 = sbr.rel (%p153) target = $region24
        $region23: #{tpu_custom_call.1} parent=11 // pred_region
          %s157 = ssub.s32 32, 32
          %158 = vsyncadd [#allocation5], %s157
          %s160 = sshll.u32 %s3, 4
          %s161 = int_to_ptr.vmem [resolvable:$true] %s160
          %163 = dma.vmem_to_smem %s161, 32, [#allocation6], [#allocation5]
        $region24: #{tpu_custom_call.1} parent=11 // pred_fallthru
          _
      $region12: #{tpu_custom_call.1} parent=5 // pred_fallthru
        _
      %p164 = scmp.lt.s32.totalorder %s17, 2
      // Predicated region
      $region25: #{tpu_custom_call.1} parent=5 // pred_check
        %p165 = pneg %p164
      $region26: #{tpu_custom_call.1} parent=5 // pred_check_branch
        %167 = sbr.rel (%p165) target = $region28
      $region27: #{tpu_custom_call.1} parent=5 // pred_region
        // Predicated region
        $region29: #{tpu_custom_call.1} parent=27 // pred_check
          %p168 = pneg %p37
        $region30: #{tpu_custom_call.1} parent=27 // pred_check_branch
          %170 = sbr.rel (%p168) target = $region32
        $region31: #{tpu_custom_call.1} parent=27 // pred_region
          %s171 = sand.u32 %s27, 1
          %s172 = scalar_lea.sflag [#allocation3], %s171
          %s173 = sand.u32 %s27, 1
          %s174 = smul.addr %s173, 64
          %s175 = scalar_lea.vmem [#allocation2], %s174
          %s176 = smul.u32 2, %s17
          %s178 = ssub.s32 1024, 1024
          %179 = vsyncadd %s172, %s178
          %s180 = smul.addr %s176, 4
          %s181 = smul.addr %s180, 128
          %s182 = scalar_lea.hbm %s0, %s181
          %s183 = sshll.u32 %s175, 4
          %s184 = int_to_ptr.vmem [resolvable:$true] %s183
          %189 = dma.hbm_to_vmem [thread:$0]  %s182, 1024, %s184, %s172, 128, 128, 8
        $region32: #{tpu_custom_call.1} parent=27 // pred_fallthru
          _
      $region28: #{tpu_custom_call.1} parent=5 // pred_fallthru
        _
      %p190 = scmp.le.s32.totalorder 1, %s17
      %p191 = scmp.lt.s32.totalorder %s17, 3
      %p192 = pnand %p190, %p191
      %p193 = pneg %p192
      // Predicated region
      $region33: #{tpu_custom_call.1} parent=5 // pred_check
        _
      $region34: #{tpu_custom_call.1} parent=5 // pred_check_branch
        %195 = sbr.rel (%p192) target = $region36
      $region35: #{tpu_custom_call.1} parent=5 // pred_region
        %s196 = ssub.s32 %s17, 1
        %s197 = sand.u32 %s30, 1
        %s198 = scalar_lea.sflag [#allocation3], %s197
        %s199 = sand.u32 %s30, 1
        %s200 = smul.addr %s199, 64
        %s201 = scalar_lea.vmem [#allocation2], %s200
        // Predicated region
        $region37: #{tpu_custom_call.1} parent=35 // pred_check
          %p202 = pneg %p43
        $region38: #{tpu_custom_call.1} parent=35 // pred_check_branch
          %204 = sbr.rel (%p202) target = $region40
        $region39: #{tpu_custom_call.1} parent=35 // pred_region
          %205 = dma.done %s198, 1024
        $region40: #{tpu_custom_call.1} parent=35 // pred_fallthru
          _
        // Predicated region
        $region41: #{tpu_custom_call.1} parent=35 // pred_check
          %p206 = pneg %p106
        $region42: #{tpu_custom_call.1} parent=35 // pred_check_branch
          %208 = sbr.rel (%p206) target = $region44
        $region43: #{tpu_custom_call.1} parent=35 // pred_region
          %209 = dma.done [#allocation5], 32
        $region44: #{tpu_custom_call.1} parent=35 // pred_fallthru
          _
        %210 = sfence
        %s211 = sand.u32 %s30, 1
        %s212 = scalar_lea.sflag [#allocation3], %s211
        %s213 = sand.u32 %s30, 1
        %s214 = smul.addr %s213, 64
        %s215 = scalar_lea.vmem [#allocation2], %s214
        %p216 = pneg %p43
        %p217 = pneg %p40
        %p218 = pneg %p64
        %p219 = pneg %p61
        %p220 = pneg %p85
        %p221 = pneg %p82
        %p222 = pneg %p106
        %p223 = pneg %p103
        %p224 = pneg %p132
        %p225 = pneg %p129
        %s226 = sand.u32 %s119, 1
        %s227 = scalar_lea.sflag [#allocation4], %s226
        %s228 = sand.u32 %s119, 1
        %s229 = smul.addr %s228, 64
        %s230 = scalar_lea.vmem [#allocation7], %s229
        %s231 = smul.u32 2, %s22
        %s232 = smul.u32 2, %s22
        %v233 = vld [vmem:[%s201] sm:$0xff]
        %v234 = vld [vmem:[%s201 + $0x8] sm:$0xff]
        %v235 = vld [vmem:[%s201 + $0x10] sm:$0xff]
        %v236 = vld [vmem:[%s201 + $0x18] sm:$0xff]
        %v237 = vld [vmem:[%s201 + $0x20] sm:$0xff]
        %v238 = vld [vmem:[%s201 + $0x28] sm:$0xff]
        %v239 = vld [vmem:[%s201 + $0x30] sm:$0xff]
        %v240 = vld [vmem:[%s201 + $0x38] sm:$0xff]
        %241 = vadd.xlane.f32.xlu0 %v233
        %v242 = vpop.xlane.xlu0 %241
        %243 = vadd.xlane.f32.xlu0 %v234
        %v244 = vpop.xlane.xlu0 %243
        %245 = vadd.xlane.f32.xlu0 %v235
        %v246 = vpop.xlane.xlu0 %245
        %247 = vadd.xlane.f32.xlu0 %v236
        %v248 = vpop.xlane.xlu0 %247
        %249 = vadd.xlane.f32.xlu0 %v237
        %v250 = vpop.xlane.xlu0 %249
        %251 = vadd.xlane.f32.xlu0 %v238
        %v252 = vpop.xlane.xlu0 %251
        %253 = vadd.xlane.f32.xlu0 %v239
        %v254 = vpop.xlane.xlu0 %253
        %255 = vadd.xlane.f32.xlu0 %v240
        %v256 = vpop.xlane.xlu0 %255
        %v257 = vrcp.pop 128.0
        %v258 = vmul.f32 %v242, %v257
        %v259 = vmul.f32 %v244, %v257
        %v260 = vmul.f32 %v246, %v257
        %v261 = vmul.f32 %v248, %v257
        %v262 = vmul.f32 %v250, %v257
        %v263 = vmul.f32 %v252, %v257
        %v264 = vmul.f32 %v254, %v257
        %v265 = vmul.f32 %v256, %v257
        %266 = vmax.xlane.f32.xlu0 %v233
        %v267 = vpop.xlane.xlu0 %266
        %268 = vmax.xlane.f32.xlu0 %v234
        %v269 = vpop.xlane.xlu0 %268
        %270 = vmax.xlane.f32.xlu0 %v235
        %v271 = vpop.xlane.xlu0 %270
        %272 = vmax.xlane.f32.xlu0 %v236
        %v273 = vpop.xlane.xlu0 %272
        %274 = vmax.xlane.f32.xlu0 %v237
        %v275 = vpop.xlane.xlu0 %274
        %276 = vmax.xlane.f32.xlu0 %v238
        %v277 = vpop.xlane.xlu0 %276
        %278 = vmax.xlane.f32.xlu0 %v239
        %v279 = vpop.xlane.xlu0 %278
        %280 = vmax.xlane.f32.xlu0 %v240
        %v281 = vpop.xlane.xlu0 %280
        %v290 = vlaneseq
        %v291 = vand.u32 %v290, 127
        %v292 = vlaneseq
        %v293 = vshrl.u32 %v292, 7
        %v294 = vsub.s32 %v291, %v293
        %v295 = vrot.slane %v258, %v294
        %v296 = vadd.s32 %v291, 4294967288
        %v297 = vlaneseq
        %v298 = vshrl.u32 %v297, 7
        %v299 = vsub.s32 %v296, %v298
        %v300 = vrot.slane %v259, %v299
        %vm301 = vcmask 130112
        %v302 = vsel %vm301, %v300, %v295
        %v303 = vadd.s32 %v291, 4294967280
        %v304 = vlaneseq
        %v305 = vshrl.u32 %v304, 7
        %v306 = vsub.s32 %v303, %v305
        %v307 = vrot.slane %v260, %v306
        %vm308 = vcmask 195712
        %v309 = vsel %vm308, %v307, %v302
        %v310 = vadd.s32 %v291, 4294967272
        %v311 = vlaneseq
        %v312 = vshrl.u32 %v311, 7
        %v313 = vsub.s32 %v310, %v312
        %v314 = vrot.slane %v261, %v313
        %vm315 = vcmask 261312
        %v316 = vsel %vm315, %v314, %v309
        %v317 = vlaneseq
        %v318 = vshrl.u32 %v317, 7
        %v319 = vsub.s32 %v291, %v318
        %v320 = vrot.slane %v262, %v319
        %v321 = vlaneseq
        %v322 = vshrl.u32 %v321, 7
        %v323 = vsub.s32 %v296, %v322
        %v324 = vrot.slane %v263, %v323
        %v325 = vsel %vm301, %v324, %v320
        %v326 = vlaneseq
        %v327 = vshrl.u32 %v326, 7
        %v328 = vsub.s32 %v303, %v327
        %v329 = vrot.slane %v264, %v328
        %v330 = vsel %vm308, %v329, %v325
        %v331 = vlaneseq
        %v332 = vshrl.u32 %v331, 7
        %v333 = vsub.s32 %v310, %v332
        %v334 = vrot.slane %v265, %v333
        %v335 = vsel %vm315, %v334, %v330
        %vm336 = vcmask 1041409
        %v337 = vsel %vm336, %v335, %v316
        %v347 = vlaneseq
        %v348 = vshrl.u32 %v347, 7
        %v349 = vsub.s32 %v291, %v348
        %v350 = vrot.slane %v267, %v349
        %v351 = vlaneseq
        %v352 = vshrl.u32 %v351, 7
        %v353 = vsub.s32 %v296, %v352
        %v354 = vrot.slane %v269, %v353
        %v355 = vsel %vm301, %v354, %v350
        %v356 = vlaneseq
        %v357 = vshrl.u32 %v356, 7
        %v358 = vsub.s32 %v303, %v357
        %v359 = vrot.slane %v271, %v358
        %v360 = vsel %vm308, %v359, %v355
        %v361 = vlaneseq
        %v362 = vshrl.u32 %v361, 7
        %v363 = vsub.s32 %v310, %v362
        %v364 = vrot.slane %v273, %v363
        %v365 = vsel %vm315, %v364, %v360
        %v366 = vlaneseq
        %v367 = vshrl.u32 %v366, 7
        %v368 = vsub.s32 %v291, %v367
        %v369 = vrot.slane %v275, %v368
        %v370 = vlaneseq
        %v371 = vshrl.u32 %v370, 7
        %v372 = vsub.s32 %v296, %v371
        %v373 = vrot.slane %v277, %v372
        %v374 = vsel %vm301, %v373, %v369
        %v375 = vlaneseq
        %v376 = vshrl.u32 %v375, 7
        %v377 = vsub.s32 %v303, %v376
        %v378 = vrot.slane %v279, %v377
        %v379 = vsel %vm308, %v378, %v374
        %v380 = vlaneseq
        %v381 = vshrl.u32 %v380, 7
        %v382 = vsub.s32 %v310, %v381
        %v383 = vrot.slane %v281, %v382
        %v384 = vsel %vm315, %v383, %v379
        %vm385 = vcmask 1043459
        %v386 = vsel %vm385, %v384, %v365
        %vm388 = vcmask 1041408
        %v389 = vsel %vm388, %v337, %v386
        %v390 = vld [vmem:[%s1] sm:$0xff]
        %v391 = vld [vmem:[%s1 + $0x8] sm:$0xff]
        %v392 = vld [vmem:[%s1 + $0x10] sm:$0xff]
        %v393 = vld [vmem:[%s1 + $0x18] sm:$0xff]
        %v394 = vld [vmem:[%s2] sm:$0x3]
        %vm395 = vcmask 261120
        %v397 = vsel %vm395, %v389, 0
        %399 = vmatprep.subr.mxu0 0.0
        %400 = vmatpush1.msra.mxu0 0.0
        %401 = vmatprep.subr.mxu0 0.0
        %402 = vmatpush1.msra.mxu0 0.0
        %403 = vmatprep.subr.mxu0 0.0
        %404 = vmatpush1.msra.mxu0 0.0
        %405 = vmatprep.subr.mxu0 0.0
        %406 = vmatpush1.msra.mxu0 0.0
        %407 = vmatprep.subr.mxu0 0.0
        %408 = vmatpush1.msra.mxu0 0.0
        %409 = vmatprep.subr.mxu0 0.0
        %410 = vmatpush1.msra.mxu0 0.0
        %411 = vmatprep.subr.mxu0 0.0
        %412 = vmatpush1.msra.mxu0 0.0
        %413 = vmatprep.subr.mxu0 0.0
        %414 = vmatpush1.msra.mxu0 0.0
        %415 = vmatprep.subr.mxu0 0.0
        %416 = vmatpush1.msra.mxu0 0.0
        %417 = vmatprep.subr.mxu0 0.0
        %418 = vmatpush1.msra.mxu0 0.0
        %419 = vmatprep.subr.mxu0 0.0
        %420 = vmatpush1.msra.mxu0 0.0
        %421 = vmatprep.subr.mxu0 0.0
        %422 = vmatpush1.msra.mxu0 0.0
        %423 = vmatprep.subr.mxu0 0.0
        %424 = vmatpush1.msra.mxu0 %v393
        %425 = vmatprep.subr.mxu0 0.0
        %426 = vmatpush1.msra.mxu0 %v392
        %427 = vmatprep.subr.mxu0 0.0
        %428 = vmatpush1.msra.mxu0 %v391
        %429 = vmatprep.subr.mxu0 0.0
        %430 = vmatpush1.msra.mxu0 %v390
        %431 = vmatprep.subr.mxu0 0.0
        %432 = vmatpush2.msra.mxu0 0.0
        %433 = vmatprep.subr.mxu0 0.0
        %434 = vmatpush2.msra.mxu0 0.0
        %435 = vmatprep.subr.mxu0 0.0
        %436 = vmatpush2.msra.mxu0 0.0
        %437 = vmatprep.subr.mxu0 0.0
        %438 = vmatpush2.msra.mxu0 0.0
        %439 = vmatprep.subr.mxu0 0.0
        %440 = vmatpush2.msra.mxu0 0.0
        %441 = vmatprep.subr.mxu0 0.0
        %442 = vmatpush2.msra.mxu0 0.0
        %443 = vmatprep.subr.mxu0 0.0
        %444 = vmatpush2.msra.mxu0 0.0
        %445 = vmatprep.subr.mxu0 0.0
        %446 = vmatpush2.msra.mxu0 0.0
        %447 = vmatprep.subr.mxu0 0.0
        %448 = vmatpush2.msra.mxu0 0.0
        %449 = vmatprep.subr.mxu0 0.0
        %450 = vmatpush2.msra.mxu0 0.0
        %451 = vmatprep.subr.mxu0 0.0
        %452 = vmatpush2.msra.mxu0 0.0
        %453 = vmatprep.subr.mxu0 0.0
        %454 = vmatpush2.msra.mxu0 0.0
        %455 = vmatprep.subr.mxu0 0.0
        %456 = vmatpush2.msra.mxu0 0.0
        %457 = vmatprep.subr.mxu0 0.0
        %458 = vmatpush2.msra.mxu0 0.0
        %459 = vmatprep.subr.mxu0 0.0
        %460 = vmatpush2.msra.mxu0 0.0
        %461 = vmatprep.subr.mxu0 0.0
        %462 = vmatpush2.msra.mxu0 0.0
        %463 = vmatprep.mubr.f32.mxu0 0.0
        %464 = vmatmul.mubr.f32.gmra.mxu0 %v397
        %v465 = vpop.f32.mrf.mxu0
        %v466 = vadd.f32 0.0, %v465
        %v467 = vpop.f32.mrf.mxu0
        %468 = vdwg.mxu0
        %v469 = vmax.f32 %v466, 0.0
        %vm470 = vcmask 15360
        %v472 = vsel %vm470, %v469, 0
        %v475 = vsel %vm388, %v394, 0
        %477 = vmatprep.subr.mxu0 0.0
        %478 = vmatpush1.msra.mxu0 0.0
        %479 = vmatprep.subr.mxu0 0.0
        %480 = vmatpush1.msra.mxu0 0.0
        %481 = vmatprep.subr.mxu0 0.0
        %482 = vmatpush1.msra.mxu0 0.0
        %483 = vmatprep.subr.mxu0 0.0
        %484 = vmatpush1.msra.mxu0 0.0
        %485 = vmatprep.subr.mxu0 0.0
        %486 = vmatpush1.msra.mxu0 0.0
        %487 = vmatprep.subr.mxu0 0.0
        %488 = vmatpush1.msra.mxu0 0.0
        %489 = vmatprep.subr.mxu0 0.0
        %490 = vmatpush1.msra.mxu0 0.0
        %491 = vmatprep.subr.mxu0 0.0
        %492 = vmatpush1.msra.mxu0 0.0
        %493 = vmatprep.subr.mxu0 0.0
        %494 = vmatpush1.msra.mxu0 0.0
        %495 = vmatprep.subr.mxu0 0.0
        %496 = vmatpush1.msra.mxu0 0.0
        %497 = vmatprep.subr.mxu0 0.0
        %498 = vmatpush1.msra.mxu0 0.0
        %499 = vmatprep.subr.mxu0 0.0
        %500 = vmatpush1.msra.mxu0 0.0
        %501 = vmatprep.subr.mxu0 0.0
        %502 = vmatpush1.msra.mxu0 0.0
        %503 = vmatprep.subr.mxu0 0.0
        %504 = vmatpush1.msra.mxu0 0.0
        %505 = vmatprep.subr.mxu0 0.0
        %506 = vmatpush1.msra.mxu0 0.0
        %507 = vmatprep.subr.mxu0 0.0
        %508 = vmatpush1.msra.mxu0 %v475
        %509 = vmatprep.subr.mxu0 0.0
        %510 = vmatpush2.msra.mxu0 0.0
        %511 = vmatprep.subr.mxu0 0.0
        %512 = vmatpush2.msra.mxu0 0.0
        %513 = vmatprep.subr.mxu0 0.0
        %514 = vmatpush2.msra.mxu0 0.0
        %515 = vmatprep.subr.mxu0 0.0
        %516 = vmatpush2.msra.mxu0 0.0
        %517 = vmatprep.subr.mxu0 0.0
        %518 = vmatpush2.msra.mxu0 0.0
        %519 = vmatprep.subr.mxu0 0.0
        %520 = vmatpush2.msra.mxu0 0.0
        %521 = vmatprep.subr.mxu0 0.0
        %522 = vmatpush2.msra.mxu0 0.0
        %523 = vmatprep.subr.mxu0 0.0
        %524 = vmatpush2.msra.mxu0 0.0
        %525 = vmatprep.subr.mxu0 0.0
        %526 = vmatpush2.msra.mxu0 0.0
        %527 = vmatprep.subr.mxu0 0.0
        %528 = vmatpush2.msra.mxu0 0.0
        %529 = vmatprep.subr.mxu0 0.0
        %530 = vmatpush2.msra.mxu0 0.0
        %531 = vmatprep.subr.mxu0 0.0
        %532 = vmatpush2.msra.mxu0 0.0
        %533 = vmatprep.subr.mxu0 0.0
        %534 = vmatpush2.msra.mxu0 0.0
        %535 = vmatprep.subr.mxu0 0.0
        %536 = vmatpush2.msra.mxu0 0.0
        %537 = vmatprep.subr.mxu0 0.0
        %538 = vmatpush2.msra.mxu0 0.0
        %539 = vmatprep.subr.mxu0 0.0
        %540 = vmatpush2.msra.mxu0 0.0
        %541 = vmatprep.mubr.f32.mxu0 0.0
        %542 = vmatmul.mubr.f32.gmra.mxu0 %v472
        %v543 = vpop.f32.mrf.mxu0
        %v544 = vadd.f32 0.0, %v543
        %v545 = vpop.f32.mrf.mxu0
        %546 = vdwg.mxu0
        %v548 = vrot.slane %v544, 2
        %v550 = vadd.f32 %v544, %v548
        %v551 = vxor.u32 %v550, 2147483648
        %v552 = vmul.f32 %v551, 1.442695
        %v553 = vpow.pop %v552
        %v554 = vadd.f32 %v553, 1.0
        %v555 = vrcp.pop %v554
        %v556 = vmul.f32 1.0, %v555
        %v557 = vlaneseq
        %v558 = vshrl.u32 %v557, 7
        %v559 = vsub.s32 0, %v558
        %v560 = vrot.slane %v556, %v559
        %562 = vbcast.lane.b32.xlu0 %v560, 256
        %v563 = vpop.permute.xlu0 %562
        %s565 = sor.u32 256, 8
        %566 = vbcast.lane.b32.xlu0 %v560, %s565
        %v567 = vpop.permute.xlu0 %566
        %s569 = sor.u32 256, 16
        %570 = vbcast.lane.b32.xlu0 %v560, %s569
        %v571 = vpop.permute.xlu0 %570
        %s573 = sor.u32 256, 24
        %574 = vbcast.lane.b32.xlu0 %v560, %s573
        %v575 = vpop.permute.xlu0 %574
        %v576 = vlaneseq
        %v577 = vshrl.u32 %v576, 7
        %v578 = vsub.s32 1, %v577
        %v579 = vrot.slane %v556, %v578
        %581 = vbcast.lane.b32.xlu0 %v579, 256
        %v582 = vpop.permute.xlu0 %581
        %s584 = sor.u32 256, 8
        %585 = vbcast.lane.b32.xlu0 %v579, %s584
        %v586 = vpop.permute.xlu0 %585
        %s588 = sor.u32 256, 16
        %589 = vbcast.lane.b32.xlu0 %v579, %s588
        %v590 = vpop.permute.xlu0 %589
        %s592 = sor.u32 256, 24
        %593 = vbcast.lane.b32.xlu0 %v579, %s592
        %v594 = vpop.permute.xlu0 %593
        %v595 = vmul.f32 %v563, %v233
        %v596 = vmul.f32 %v567, %v234
        %v597 = vmul.f32 %v571, %v235
        %v598 = vmul.f32 %v575, %v236
        %v599 = vmul.f32 %v582, %v237
        %v600 = vmul.f32 %v586, %v238
        %v601 = vmul.f32 %v590, %v239
        %v602 = vmul.f32 %v594, %v240
        %v603 = vadd.f32 %v595, %v596
        %v604 = vadd.f32 %v603, %v597
        %v605 = vadd.f32 %v604, %v598
        %v606 = vrot.slane %v605, 4
        %v607 = vadd.f32 %v605, %v606
        %v608 = vrot.slane %v607, 2
        %v609 = vadd.f32 %v607, %v608
        %v610 = vrot.slane %v609, 1
        %v611 = vadd.f32 %v609, %v610
        %v612 = vadd.f32 %v599, %v600
        %v613 = vadd.f32 %v612, %v601
        %v614 = vadd.f32 %v613, %v602
        %v615 = vrot.slane %v614, 4
        %v616 = vadd.f32 %v614, %v615
        %v617 = vrot.slane %v616, 2
        %v618 = vadd.f32 %v616, %v617
        %v619 = vrot.slane %v618, 1
        %v620 = vadd.f32 %v618, %v619
        %v621 = vrcp.pop 32.0
        %v622 = vmul.f32 %v611, %v621
        %v623 = vmul.f32 %v620, %v621
        %v624 = vmax.f32 %v595, %v597
        %v625 = vmax.f32 %v596, %v598
        %v626 = vmax.f32 %v624, %v625
        %v627 = vrot.slane %v626, 4
        %v628 = vmax.f32 %v626, %v627
        %v629 = vrot.slane %v628, 2
        %v630 = vmax.f32 %v628, %v629
        %v631 = vrot.slane %v630, 1
        %v632 = vmax.f32 %v630, %v631
        %v633 = vmax.f32 %v599, %v601
        %v634 = vmax.f32 %v600, %v602
        %v635 = vmax.f32 %v633, %v634
        %v636 = vrot.slane %v635, 4
        %v637 = vmax.f32 %v635, %v636
        %v638 = vrot.slane %v637, 2
        %v639 = vmax.f32 %v637, %v638
        %v640 = vrot.slane %v639, 1
        %v641 = vmax.f32 %v639, %v640
        %v644 = vsel %vm336, %v623, %v622
        %645 = vrot.lane.b32.xlu0 %v644, 3
        %v646 = vpop.permute.xlu0 %645
        %vm648 = vcmask 23552
        %v649 = vsel %vm648, 0.0, %v646
        %v650 = vsel %vm648, %v646, 0.0
        %v653 = vsel %vm336, %v641, %v632
        %654 = vrot.lane.b32.xlu0 %v653, 3
        %v655 = vpop.permute.xlu0 %654
        %v657 = vsel %vm648, 0.0, %v655
        %v658 = vsel %vm648, %v655, 0.0
        %s659 = sld [smem:[#allocation6]]
        %s660 = sld [smem:[#allocation6 + $0x1]]
        %s661 = sld [smem:[#allocation6 + $0x2]]
        %s662 = sld [smem:[#allocation6 + $0x3]]
        %s663 = sld [smem:[#allocation6 + $0x4]]
        %s664 = sld [smem:[#allocation6 + $0x5]]
        %s665 = sld [smem:[#allocation6 + $0x6]]
        %s666 = sld [smem:[#allocation6 + $0x80]]
        %s667 = sld [smem:[#allocation6 + $0x81]]
        %s668 = sld [smem:[#allocation6 + $0x82]]
        %s669 = sld [smem:[#allocation6 + $0x83]]
        %s670 = sld [smem:[#allocation6 + $0x84]]
        %s671 = sld [smem:[#allocation6 + $0x85]]
        %s672 = sld [smem:[#allocation6 + $0x86]]
        %v673 = vstv %s659
        %v674 = vmul.f32 %v673, %v649
        %v675 = vadd.f32 %v674, 0.0
        %v676 = vstv %s666
        %v677 = vmul.f32 %v676, %v657
        %v678 = vadd.f32 %v675, %v677
        %v679 = vstv %s660
        %v680 = vmul.f32 %v679, %v649
        %v681 = vmul.f32 %v679, %v650
        %684 = vrot.lane.b32.xlu0 %v680, 127
        %v685 = vpop.permute.xlu0 %684
        %686 = vrot.lane.b32.xlu0 %v681, 127
        %v687 = vpop.permute.xlu0 %686
        %vm688 = vcmask 1039360
        %v689 = vsel %vm688, %v685, %v687
        %v691 = vadd.f32 %v678, %v689
        %v692 = vstv %s667
        %v693 = vmul.f32 %v692, %v657
        %v694 = vmul.f32 %v692, %v658
        %697 = vrot.lane.b32.xlu0 %v693, 127
        %v698 = vpop.permute.xlu0 %697
        %699 = vrot.lane.b32.xlu0 %v694, 127
        %v700 = vpop.permute.xlu0 %699
        %v701 = vsel %vm688, %v698, %v700
        %v703 = vadd.f32 %v691, %v701
        %v704 = vstv %s661
        %v705 = vmul.f32 %v704, %v649
        %v706 = vmul.f32 %v704, %v650
        %709 = vrot.lane.b32.xlu0 %v705, 126
        %v710 = vpop.permute.xlu0 %709
        %711 = vrot.lane.b32.xlu0 %v706, 126
        %v712 = vpop.permute.xlu0 %711
        %vm713 = vcmask 1031168
        %v714 = vsel %vm713, %v710, %v712
        %v716 = vadd.f32 %v703, %v714
        %v717 = vstv %s668
        %v718 = vmul.f32 %v717, %v657
        %v719 = vmul.f32 %v717, %v658
        %722 = vrot.lane.b32.xlu0 %v718, 126
        %v723 = vpop.permute.xlu0 %722
        %724 = vrot.lane.b32.xlu0 %v719, 126
        %v725 = vpop.permute.xlu0 %724
        %v726 = vsel %vm713, %v723, %v725
        %v728 = vadd.f32 %v716, %v726
        %v729 = vstv %s662
        %v730 = vmul.f32 %v729, %v649
        %v731 = vmul.f32 %v729, %v650
        %734 = vrot.lane.b32.xlu0 %v730, 125
        %v735 = vpop.permute.xlu0 %734
        %736 = vrot.lane.b32.xlu0 %v731, 125
        %v737 = vpop.permute.xlu0 %736
        %vm738 = vcmask 1022976
        %v739 = vsel %vm738, %v735, %v737
        %v741 = vadd.f32 %v728, %v739
        %v742 = vstv %s669
        %v743 = vmul.f32 %v742, %v657
        %v744 = vmul.f32 %v742, %v658
        %747 = vrot.lane.b32.xlu0 %v743, 125
        %v748 = vpop.permute.xlu0 %747
        %749 = vrot.lane.b32.xlu0 %v744, 125
        %v750 = vpop.permute.xlu0 %749
        %v751 = vsel %vm738, %v748, %v750
        %v753 = vadd.f32 %v741, %v751
        %v754 = vstv %s663
        %v755 = vmul.f32 %v754, %v649
        %v756 = vmul.f32 %v754, %v650
        %759 = vrot.lane.b32.xlu0 %v755, 124
        %v760 = vpop.permute.xlu0 %759
        %761 = vrot.lane.b32.xlu0 %v756, 124
        %v762 = vpop.permute.xlu0 %761
        %vm763 = vcmask 1014784
        %v764 = vsel %vm763, %v760, %v762
        %v766 = vadd.f32 %v753, %v764
        %v767 = vstv %s670
        %v768 = vmul.f32 %v767, %v657
        %v769 = vmul.f32 %v767, %v658
        %772 = vrot.lane.b32.xlu0 %v768, 124
        %v773 = vpop.permute.xlu0 %772
        %774 = vrot.lane.b32.xlu0 %v769, 124
        %v775 = vpop.permute.xlu0 %774
        %v776 = vsel %vm763, %v773, %v775
        %v778 = vadd.f32 %v766, %v776
        %v779 = vstv %s664
        %v780 = vmul.f32 %v779, %v649
        %v781 = vmul.f32 %v779, %v650
        %784 = vrot.lane.b32.xlu0 %v780, 123
        %v785 = vpop.permute.xlu0 %784
        %786 = vrot.lane.b32.xlu0 %v781, 123
        %v787 = vpop.permute.xlu0 %786
        %vm788 = vcmask 1006592
        %v789 = vsel %vm788, %v785, %v787
        %v791 = vadd.f32 %v778, %v789
        %v792 = vstv %s671
        %v793 = vmul.f32 %v792, %v657
        %v794 = vmul.f32 %v792, %v658
        %797 = vrot.lane.b32.xlu0 %v793, 123
        %v798 = vpop.permute.xlu0 %797
        %799 = vrot.lane.b32.xlu0 %v794, 123
        %v800 = vpop.permute.xlu0 %799
        %v801 = vsel %vm788, %v798, %v800
        %v803 = vadd.f32 %v791, %v801
        %v804 = vstv %s665
        %v805 = vmul.f32 %v804, %v649
        %v806 = vmul.f32 %v804, %v650
        %809 = vrot.lane.b32.xlu0 %v805, 122
        %v810 = vpop.permute.xlu0 %809
        %811 = vrot.lane.b32.xlu0 %v806, 122
        %v812 = vpop.permute.xlu0 %811
        %vm813 = vcmask 998400
        %v814 = vsel %vm813, %v810, %v812
        %v816 = vadd.f32 %v803, %v814
        %v817 = vstv %s672
        %v818 = vmul.f32 %v817, %v657
        %v819 = vmul.f32 %v817, %v658
        %822 = vrot.lane.b32.xlu0 %v818, 122
        %v823 = vpop.permute.xlu0 %822
        %824 = vrot.lane.b32.xlu0 %v819, 122
        %v825 = vpop.permute.xlu0 %824
        %v826 = vsel %vm813, %v823, %v825
        %v828 = vadd.f32 %v816, %v826
        %v829 = vxor.u32 %v828, 2147483648
        %v830 = vmul.f32 %v829, 1.442695
        %v831 = vpow.pop %v830
        %v832 = vadd.f32 %v831, 1.0
        %v833 = vrcp.pop %v832
        %v834 = vmul.f32 1.0, %v833
        %v837 = vunpack.c.l.s4 1966171168
        %v838 = vunpack.c.0.s8 %v837
        %v839 = vlaneseq
        %v840 = vshrl.u32 %v839, 7
        %v841 = vsub.s32 %v838, %v840
        %v842 = vrot.slane %v834, %v841
        %v843 = vcombine.high %v842, %v842
        %v845 = vunpack.c.l.s4 1966171168
        %v846 = vunpack.c.0.s8 %v845
        %v847 = vlaneseq
        %v848 = vshrl.u32 %v847, 7
        %v849 = vsub.s32 %v846, %v848
        %v850 = vrot.slane %v842, %v849
        %v852 = vunpack.c.l.s4 1966171168
        %v853 = vunpack.c.0.s8 %v852
        %v854 = vlaneseq
        %v855 = vshrl.u32 %v854, 7
        %v856 = vsub.s32 %v853, %v855
        %v857 = vrot.slane %v843, %v856
        %v858 = vlaneseq
        %v859 = vshrl.u32 %v858, 7
        %v860 = vsub.s32 0, %v859
        %v861 = vrot.slane %v850, %v860
        %v862 = vlaneseq
        %v863 = vshrl.u32 %v862, 7
        %v864 = vsub.s32 0, %v863
        %v865 = vrot.slane %v857, %v864
        %v868 = vmul.f32 %v861, %v595
        %v869 = vmul.f32 %v861, %v596
        %v870 = vmul.f32 %v861, %v597
        %v871 = vmul.f32 %v861, %v598
        %v872 = vmul.f32 %v865, %v599
        %v873 = vmul.f32 %v865, %v600
        %v874 = vmul.f32 %v865, %v601
        %v875 = vmul.f32 %v865, %v602
        %876 = vst [vmem:[%s230] sm:$0xff] %v868
        %877 = vst [vmem:[%s230 + $0x8] sm:$0xff] %v869
        %878 = vst [vmem:[%s230 + $0x10] sm:$0xff] %v870
        %879 = vst [vmem:[%s230 + $0x18] sm:$0xff] %v871
        %880 = vst [vmem:[%s230 + $0x20] sm:$0xff] %v872
        %881 = vst [vmem:[%s230 + $0x28] sm:$0xff] %v873
        %882 = vst [vmem:[%s230 + $0x30] sm:$0xff] %v874
        %883 = vst [vmem:[%s230 + $0x38] sm:$0xff] %v875
        %s884 = sand.u32 %s119, 1
        %s885 = scalar_lea.sflag [#allocation4], %s884
        %s886 = sand.u32 %s119, 1
        %s887 = smul.addr %s886, 64
        %s888 = scalar_lea.vmem [#allocation7], %s887
        // Predicated region
        $region45: #{tpu_custom_call.1} parent=35 // pred_check
          %p889 = pneg %p129
        $region46: #{tpu_custom_call.1} parent=35 // pred_check_branch
          %891 = sbr.rel (%p889) target = $region48
        $region47: #{tpu_custom_call.1} parent=35 // pred_region
          %s892 = smul.u32 2, %s22
          %s894 = ssub.s32 1024, 1024
          %895 = vsyncadd %s885, %s894
          %s896 = smul.addr %s892, 4
          %s897 = smul.addr %s896, 128
          %s898 = scalar_lea.hbm %s4, %s897
          %s899 = sshll.u32 %s888, 4
          %s900 = int_to_ptr.vmem [resolvable:$true] %s899
          %905 = dma.vmem_to_hbm [thread:$0]  %s900, 1024, %s898, %s885, 128, 128, 8
        $region48: #{tpu_custom_call.1} parent=35 // pred_fallthru
          _
      $region36: #{tpu_custom_call.1} parent=5 // pred_fallthru
        _
      %p906 = scmp.le.s32.totalorder 2, %s17
      // Predicated region
      $region49: #{tpu_custom_call.1} parent=5 // pred_check
        %p907 = pneg %p906
      $region50: #{tpu_custom_call.1} parent=5 // pred_check_branch
        %909 = sbr.rel (%p907) target = $region52
      $region51: #{tpu_custom_call.1} parent=5 // pred_region
        %s910 = ssub.s32 %s17, 2
        // Predicated region
        $region53: #{tpu_custom_call.1} parent=51 // pred_check
          %p911 = pneg %p135
        $region54: #{tpu_custom_call.1} parent=51 // pred_check_branch
          %913 = sbr.rel (%p911) target = $region56
        $region55: #{tpu_custom_call.1} parent=51 // pred_region
          %s914 = sand.u32 %s120, 1
          %s915 = scalar_lea.sflag [#allocation4], %s914
          %s916 = sand.u32 %s120, 1
          %s917 = smul.addr %s916, 64
          %s918 = scalar_lea.vmem [#allocation7], %s917
          %919 = dma.done %s915, 1024
        $region56: #{tpu_custom_call.1} parent=51 // pred_fallthru
          _
      $region52: #{tpu_custom_call.1} parent=5 // pred_fallthru
        _
    $region6: #{tpu_custom_call.1} parent=1 // loop_footer
      %s21 = sadd.s32 1, %s17
    $region7: #{tpu_custom_call.1} parent=1 // loop_footer_branch
      %16 = sbr.rel target = $region3
    $region8: #{tpu_custom_call.1} parent=1 // loop_exit
      _
    %920 = vsyncpa [#allocation3], 1
    %s921 = scalar_lea.sflag [#allocation3], 1
    %922 = vsyncpa %s921, 1
    %923 = vsyncpa [#allocation4], 1
    %s924 = scalar_lea.sflag [#allocation4], 1
    %925 = vsyncpa %s924, 1
    %926 = vsyncpa [#allocation5], 1
    %s927 = scalar_lea.sflag [#allocation5], 1
    %928 = vsyncpa %s927, 1

</llo_original>
